<compile_context>
chip_gen: v5e
topology: v5e:2x2
jax: 0.10.0
libtpu: 0.0.40
codegen_flags: <defaults>
</compile_context>

<pallas_src>
import functools

import jax
import jax.numpy as jnp
from jax.experimental import pallas as pl
from jax.experimental.pallas import tpu as pltpu

LANES = 128
MAX_ROW_TILE = 8192            # rows per grid step (multiple of 8); 4 MiB f32/input/buffer
_SMALL_FALLBACK_ELEMS = 1024   # below this, plain XLA beats pallas_call fixed cost.
                               # TODO(synk): raise toward ~1e6 in production; kept small so
                               # the demo below actually exercises the kernel.


def _first_int_attr(obj, names):
    for n in names:
        v = getattr(obj, n, None)
        if v is None:
            continue
        try:
            v = int(v)
        except (TypeError, ValueError):
            continue
        if v > 0:
            return v
    return None


def _tpu_config():
    """Return (num_tensorcores, vmem_limit_bytes), defensively across generations."""
    ncores = None
    vmem_phys = None
    try:
        info = pltpu.get_tpu_info()
        ncores = _first_int_attr(
            info, ("num_cores", "core_count", "num_tensorcores", "tensorcore_count"))
        vmem_phys = _first_int_attr(info, ("vmem_capacity_bytes", "vmem_bytes"))
    except Exception:
        pass
    if ncores is None:
        try:
            kind = jax.devices()[0].device_kind.lower()
            ncores = 2 if ("v7" in kind or "7x" in kind) else 1
        except Exception:
            ncores = 1
    ncores = max(1, min(int(ncores), 2))
    if vmem_phys is None:
        vmem_phys = 64 * 1024 * 1024          # conservative (v7x-sized)
    vmem_limit = min(64 * 1024 * 1024, (vmem_phys * 3) // 4)
    vmem_limit = max(vmem_limit, 16 * 1024 * 1024)
    return ncores, vmem_limit


def _rmse_partial_kernel(p_ref, t_ref, o_ref, acc_ref, *,
                         rows, row_tile, acc_rows, blocks_per_core, nblocks):
    c = pl.program_id(0)               # core-split axis ("parallel")
    j = pl.program_id(1)               # reduction axis ("arbitrary")
    n_j = pl.num_programs(1)
    gb = c * blocks_per_core + j       # intended global block index (ghosts >= nblocks)

    @pl.when(j == 0)
    def _():
        acc_ref[...] = jnp.zeros_like(acc_ref)

    p = p_ref[...].astype(jnp.float32)
    t = t_ref[...].astype(jnp.float32)
    # sigmoid(x) = 0.5*tanh(0.5*x) + 0.5  -> exactly one EUP op per element.
    d = 0.5 * jnp.tanh(0.5 * p) + (0.5 - t)
    sq = d * d

    def _fold(x):
        # (row_tile, 128) -> (acc_rows, 128): pure vreg-to-vreg VPU adds
        # (reshape splits the sublane axis; no XLU work).
        return x.reshape(-1, acc_rows, LANES).sum(axis=0)

    # Trace-time Python ints: no int32 flat-index math is ever needed.
    valid_rows_last = rows - (nblocks - 1) * row_tile       # in [1, row_tile]
    last_is_full = valid_rows_last == row_tile

    full_cond = (gb < nblocks) if last_is_full else (gb < nblocks - 1)

    @pl.when(full_cond)
    def _():
        acc_ref[...] += _fold(sq)

    if not last_is_full:
        # Partial last real block: mask rows past the end using only
        # tile-local row indices (bounded by row_tile).
        @pl.when(gb == nblocks - 1)
        def _():
            row_ids = jax.lax.broadcasted_iota(jnp.int32, (row_tile, LANES), 0)
            masked = jnp.where(row_ids < valid_rows_last, sq, jnp.float32(0.0))
            acc_ref[...] += _fold(masked)

    # Ghost blocks (gb >= nblocks, only when nblocks % ncores != 0) fall
    # through without touching the accumulator.

    # Single cross-lane reduce + scalar store per core, only at the end.
    @pl.when(j == n_j - 1)
    def _():
        o_ref[0, 0] = jnp.sum(acc_ref[...])


def rmse_pallas(predicted, target, eps=1e-6, max_row_tile=MAX_ROW_TILE):
    assert predicted.shape == target.shape
    n_total = int(predicted.size)
    eps32 = jnp.float32(eps)

    # Tiny inputs: pallas_call fixed cost dominates; just use XLA.
    if n_total < _SMALL_FALLBACK_ELEMS:
        d = jax.nn.sigmoid(predicted.astype(jnp.float32)) - target.astype(jnp.float32)
        return jnp.sqrt(jnp.sum(d * d) / jnp.float32(n_total) + eps32)

    p_flat = predicted.reshape(-1)
    t_flat = target.reshape(-1)

    rows = n_total // LANES            # whole 128-lane rows
    rem = n_total - rows * LANES       # <=127 leftover elements

    tail_sum = jnp.float32(0.0)
    if rem:
        # Remainder handled by a tiny XLA reduction (no full-array pad copy).
        # TODO(synk): for very large ragged inputs the aligned-prefix slice may
        # still materialize a copy in XLA; a manual-DMA (pl.ANY) variant of the
        # kernel would make it truly zero-copy.
        p_tail = p_flat[rows * LANES:].astype(jnp.float32)
        t_tail = t_flat[rows * LANES:].astype(jnp.float32)
        dt = jax.nn.sigmoid(p_tail) - t_tail
        tail_sum = jnp.sum(dt * dt)
        p_flat = p_flat[: rows * LANES]
        t_flat = t_flat[: rows * LANES]

    p2d = p_flat.reshape(rows, LANES)
    t2d = t_flat.reshape(rows, LANES)

    ncores, vmem_limit = _tpu_config()

    # Row-tile selection: biggest tile the scoped VMEM budget allows
    # (2 inputs x 2 pipeline buffers + ~4 live f32 temporaries per row),
    # capped at max_row_tile and at the array itself.
    in_bytes_per_row = LANES * 2 * (p2d.dtype.itemsize + t2d.dtype.itemsize)
    tmp_bytes_per_row = LANES * 4 * 4
    budget_rows = (vmem_limit - (4 << 20)) // (in_bytes_per_row + tmp_bytes_per_row)
    budget_rows = max(8, (int(budget_rows) // 8) * 8)
    cap = min(max_row_tile, budget_rows)
    row_tile = rows if rows <= cap else cap

    # Accumulator rows: small power-of-two divisor of the tile (>=4 vregs when
    # possible so there is no single serial add chain); whole tile if tiny.
    acc_rows = row_tile
    for cand in (64, 32, 16, 8):
        if row_tile % cand == 0:
            acc_rows = cand
            break

    nblocks = pl.cdiv(rows, row_tile)
    cpc = pl.cdiv(nblocks, ncores)     # reduction steps per core

    def in_map(c, j):
        # Clamp ghost blocks (when nblocks % ncores != 0) to a valid DMA
        # source; the kernel skips their contribution entirely.
        return (jnp.minimum(c * cpc + j, nblocks - 1), 0)

    kernel = functools.partial(
        _rmse_partial_kernel, rows=rows, row_tile=row_tile, acc_rows=acc_rows,
        blocks_per_core=cpc, nblocks=nblocks)

    partials = pl.pallas_call(
        kernel,
        out_shape=jax.ShapeDtypeStruct((ncores, 1), jnp.float32),
        grid_spec=pltpu.PrefetchScalarGridSpec(
            num_scalar_prefetch=0,
            grid=(ncores, cpc),
            in_specs=[
                pl.BlockSpec((row_tile, LANES), in_map),
                pl.BlockSpec((row_tile, LANES), in_map),
            ],
            out_specs=pl.BlockSpec(
                (1, 1), lambda c, j: (c, 0), memory_space=pltpu.SMEM
            ),
            scratch_shapes=[pltpu.VMEM((acc_rows, LANES), jnp.float32)],
        ),
        compiler_params=pltpu.CompilerParams(
            # TODO(synk): on v7x, verify in a profile that the leading axis is
            # really sharded across both TensorCores; if one TC idles, switch
            # this axis to pltpu.CORE_PARALLEL.
            dimension_semantics=("parallel", "arbitrary"),
            vmem_limit_bytes=int(vmem_limit),
        ),
    )(p2d, t2d)

    total = jnp.sum(partials) + tail_sum
    return jnp.sqrt(total / jnp.float32(n_total) + eps32)


def rmse_ref(predicted, target, eps=1e-6):
    s = jax.nn.sigmoid(predicted.astype(jnp.float32))
    return jnp.sqrt(jnp.mean((s - target.astype(jnp.float32)) ** 2) + eps)


if __name__ == "__main__":
    key = jax.random.PRNGKey(0)
    k1, k2, k3, k4, k5, k6 = jax.random.split(key, 6)

    # Primary: NCHW-like logits / targets (2048 elems -> kernel path, aligned).
    shape = (2, 4, 16, 16)
    predicted = jax.random.normal(k1, shape, dtype=jnp.float32)
    target = jax.random.uniform(k2, shape, dtype=jnp.float32)
    out = jax.block_until_ready(rmse_pallas(predicted, target))
    ref = rmse_ref(predicted, target)
    assert jnp.allclose(out, ref, atol=1e-5, rtol=1e-5), (out, ref)

    # Secondary: tiny ragged size -> XLA fallback path.
    shape2 = (3, 5, 7)
    p2 = jax.random.normal(k3, shape2, dtype=jnp.float32)
    t2 = jax.random.uniform(k4, shape2, dtype=jnp.float32)
    out2 = jax.block_until_ready(rmse_pallas(p2, t2))
    ref2 = rmse_ref(p2, t2)
    assert jnp.allclose(out2, ref2, atol=1e-5, rtol=1e-5), (out2, ref2)

    # Tertiary: ragged kernel path with a forced small row tile so the
    # in-kernel partial-block masking, ghost-block skip and wrapper tail-sum
    # are all exercised (5676 elems = 44 aligned rows + 44 remainder).
    shape3 = (11, 4, 129)
    p3 = jax.random.normal(k5, shape3, dtype=jnp.float32)
    t3 = jax.random.uniform(k6, shape3, dtype=jnp.float32)
    out3 = jax.block_until_ready(rmse_pallas(p3, t3, max_row_tile=16))
    ref3 = rmse_ref(p3, t3)
    assert jnp.allclose(out3, ref3, atol=1e-5, rtol=1e-5), (out3, ref3)

    print("KERNEL_OK")
</pallas_src>

<mosaic_0001>
module attributes {stable_mosaic.version = 11 : i64} {
  func.func @_rmse_partial_kernel(%arg0: i32, %arg1: i32, %arg2: memref<16x128xf32, #tpu.memory_space<vmem>>, %arg3: memref<16x128xf32, #tpu.memory_space<vmem>>, %arg4: memref<1x1xf32, #tpu.memory_space<smem>>, %arg5: memref<16x128xf32, #tpu.memory_space<vmem>>) attributes {dimension_semantics = [#tpu.dimension_semantics<parallel>, #tpu.dimension_semantics<arbitrary>], iteration_bounds = array<i64: 1, 1>, scalar_prefetch = 0 : i64, scratch_operands = 1 : i64, tpu.core_type = #tpu.core_type<tc>, window_params = [{transform_indices = @transform_0, window_bounds = array<i64: 16, 128>}, {transform_indices = @transform_1, window_bounds = array<i64: 16, 128>}, {transform_indices = @transform_2, window_bounds = array<i64: 1, 1>}]} {
    %c1_i32 = arith.constant 1 : i32
    %0 = arith.muli %arg0, %c1_i32 : i32
    %1 = arith.addi %0, %arg1 : i32
    %c0_i32 = arith.constant 0 : i32
    %2 = arith.cmpi eq, %arg1, %c0_i32 : i32
    %3 = arith.extui %2 : i1 to i32
    %c0_i32_0 = arith.constant 0 : i32
    %4 = arith.cmpi ne, %3, %c0_i32_0 : i32
    scf.if %4 {
      %cst_10 = arith.constant 0.000000e+00 : f32
      %22 = vector.broadcast %cst_10 : f32 to vector<16x128xf32>
      %c0_11 = arith.constant 0 : index
      %c0_12 = arith.constant 0 : index
      %23 = vector.load %arg5[%c0_11, %c0_12] : memref<16x128xf32, #tpu.memory_space<vmem>>, vector<16x128xf32>
      tpu.vector_store %arg5[%c0_11, %c0_12], %22 {strides = array<i32>} : memref<16x128xf32, #tpu.memory_space<vmem>>, vector<16x128xf32>,
    } else {
    }
    %c0 = arith.constant 0 : index
    %c0_1 = arith.constant 0 : index
    %5 = vector.load %arg2[%c0, %c0_1] : memref<16x128xf32, #tpu.memory_space<vmem>>, vector<16x128xf32>
    %c0_2 = arith.constant 0 : index
    %c0_3 = arith.constant 0 : index
    %6 = vector.load %arg3[%c0_2, %c0_3] : memref<16x128xf32, #tpu.memory_space<vmem>>, vector<16x128xf32>
    %cst = arith.constant 5.000000e-01 : f32
    %7 = vector.broadcast %cst : f32 to vector<16x128xf32>
    %8 = arith.mulf %7, %5 : vector<16x128xf32>
    %9 = math.tanh %8 : vector<16x128xf32>
    %cst_4 = arith.constant 5.000000e-01 : f32
    %10 = vector.broadcast %cst_4 : f32 to vector<16x128xf32>
    %11 = arith.mulf %10, %9 : vector<16x128xf32>
    %cst_5 = arith.constant 5.000000e-01 : f32
    %12 = vector.broadcast %cst_5 : f32 to vector<16x128xf32>
    %13 = arith.subf %12, %6 : vector<16x128xf32>
    %14 = arith.addf %11, %13 : vector<16x128xf32>
    %15 = arith.mulf %14, %14 : vector<16x128xf32>
    %c1_i32_6 = arith.constant 1 : i32
    %16 = arith.cmpi slt, %1, %c1_i32_6 : i32
    %17 = arith.extui %16 : i1 to i32
    %c0_i32_7 = arith.constant 0 : i32
    %18 = arith.cmpi ne, %17, %c0_i32_7 : i32
    scf.if %18 {
      %c0_10 = arith.constant 0 : index
      %c0_11 = arith.constant 0 : index
      %22 = vector.load %arg5[%c0_10, %c0_11] : memref<16x128xf32, #tpu.memory_space<vmem>>, vector<16x128xf32>
      %23 = vector.shape_cast %15 : vector<16x128xf32> to vector<1x16x128xf32>
      %cst_12 = arith.constant dense<0.000000e+00> : vector<16x128xf32>
      %24 = vector.multi_reduction <add>, %23, %cst_12 [0] : vector<1x16x128xf32> to vector<16x128xf32>
      %25 = arith.addf %22, %24 : vector<16x128xf32>
      %c0_13 = arith.constant 0 : index
      %c0_14 = arith.constant 0 : index
      %26 = vector.load %arg5[%c0_13, %c0_14] : memref<16x128xf32, #tpu.memory_space<vmem>>, vector<16x128xf32>
      tpu.vector_store %arg5[%c0_13, %c0_14], %25 {strides = array<i32>} : memref<16x128xf32, #tpu.memory_space<vmem>>, vector<16x128xf32>,
    } else {
    }
    %c0_i32_8 = arith.constant 0 : i32
    %19 = arith.cmpi eq, %arg1, %c0_i32_8 : i32
    %20 = arith.extui %19 : i1 to i32
    %c0_i32_9 = arith.constant 0 : i32
    %21 = arith.cmpi ne, %20, %c0_i32_9 : i32
    scf.if %21 {
      %c0_10 = arith.constant 0 : index
      %c0_11 = arith.constant 0 : index
      %22 = vector.load %arg5[%c0_10, %c0_11] : memref<16x128xf32, #tpu.memory_space<vmem>>, vector<16x128xf32>
      %23 = vector.shape_cast %22 : vector<16x128xf32> to vector<1x16x128xf32>
      %cst_12 = arith.constant dense<0.000000e+00> : vector<1xf32>
      %24 = vector.multi_reduction <add>, %23, %cst_12 [1, 2] : vector<1x16x128xf32> to vector<1xf32>
      %25 = vector.shape_cast %24 : vector<1xf32> to vector<1x1x1xf32>
      %26 = vector.extract %25[0, 0, 0] : f32 from vector<1x1x1xf32>
      %c0_13 = arith.constant 0 : index
      %c0_14 = arith.constant 0 : index
      %27 = memref.load %arg4[%c0_13, %c0_14] : memref<1x1xf32, #tpu.memory_space<smem>>
      memref.store %26, %arg4[%c0_13, %c0_14] : memref<1x1xf32, #tpu.memory_space<smem>>
    } else {
    }
    return
  }
  func.func @transform_0(%arg0: i32, %arg1: i32) -> (i32, i32) {
    %c1_i32 = arith.constant 1 : i32
    %0 = arith.muli %arg0, %c1_i32 : i32
    %1 = arith.addi %0, %arg1 : i32
    %c0_i32 = arith.constant 0 : i32
    %2 = arith.minsi %1, %c0_i32 : i32
    %c0_i32_0 = arith.constant 0 : i32
    %c0_i32_1 = arith.constant 0 : i32
    return %2, %c0_i32_0 : i32, i32
  }
  func.func @transform_1(%arg0: i32, %arg1: i32) -> (i32, i32) {
    %c1_i32 = arith.constant 1 : i32
    %0 = arith.muli %arg0, %c1_i32 : i32
    %1 = arith.addi %0, %arg1 : i32
    %c0_i32 = arith.constant 0 : i32
    %2 = arith.minsi %1, %c0_i32 : i32
    %c0_i32_0 = arith.constant 0 : i32
    %c0_i32_1 = arith.constant 0 : i32
    return %2, %c0_i32_0 : i32, i32
  }
  func.func @transform_2(%arg0: i32, %arg1: i32) -> (i32, i32) {
    %c0_i32 = arith.constant 0 : i32
    %c0_i32_0 = arith.constant 0 : i32
    return %arg0, %c0_i32 : i32, i32
  }
}

</mosaic_0001>

<llo_original>
// kernel: tpu_custom_call.1
$region0: #{tpu_custom_call.1}
  #allocation0 [shape = 'u32[]', space=smem, size = 0x4, offset = 0x4, fixed_abs, tag = 'smem constant byte address 0x4 - core index']
  #allocation1 [shape = 'u32[72,128]{1,0:T(1,128)}', space=vmem, size = 0x9000, scoped, tag = 'internal scratch']
  #allocation2 [shape = 'f32[16,128]{1,0:T(8,128)}', space=vmem, size = 0x2000, scoped, tag = 'scratch operand']
  %s0 = inlined_call_operand.hbm [shape: f32[16,128], index: 0, kind: input, shape index: {}]
  %s1 = inlined_call_operand.hbm [shape: f32[16,128], index: 1, kind: input, shape index: {}]
  %s2 = inlined_call_operand.hbm [shape: f32[1,1], index: 2, kind: output, shape index: {}]
  %s3 = sld [smem:[#allocation0]]
  $region38: #{tpu_custom_call.1} parent=0
    _
  %s5 = ssub.s32 1, %s3
  %s6 = scalar_select 0, %s5, %s3
  $region1: #{tpu_custom_call.1} parent=0
    #allocation3 [shape = 'u8[8192]{0}', space=vmem, size = 0x2000, scoped, tag = 'input window, operand 0, single buffered']
    #allocation4 [shape = 's32[1]{0}', space=sflag, size = 0x4, scoped, tag = 'scoped memory for tpu_custom_call.1']
    #allocation5 [shape = 's32[1]{0}', space=sflag, size = 0x4, scoped, tag = 'scoped memory for tpu_custom_call.1']
    #allocation6 [shape = 'u8[8192]{0}', space=vmem, size = 0x2000, scoped, tag = 'input window, operand 1, single buffered']
    #allocation7 [shape = 's32[1]{0}', space=sflag, size = 0x4, scoped, tag = 'scoped memory for tpu_custom_call.1']
    #allocation8 [shape = 'u8[512]{0}', space=smem, size = 0x200, scoped, tag = 'output window, operand 0, single buffered']
    %7 = vsyncpa [#allocation4], 0
    %8 = vsyncpa [#allocation7], 0
    %9 = vsyncpa [#allocation5], 0
    // Predicated region
    $region2: #{tpu_custom_call.1} parent=1 // pred_check
      _
    $region3: #{tpu_custom_call.1} parent=1 // pred_check_branch
      %11 = sbr.rel (0) target = $region5
    $region4: #{tpu_custom_call.1} parent=1 // pred_region
      %s12 = sadd.s32 0, 0
      %p13 = scmp.lt.s32.totalorder %s12, 0
      %s14 = scalar_select %p13, %s12, 0
      %s15 = smul.u32 2, %s14
      %17 = vsyncadd [#allocation4], 0
      %s18 = smul.addr %s15, 8
      %s19 = scalar_lea.hbm %s0, %s18
      %s20 = sshll.u32 %s19, 4
      %s21 = int_to_ptr.hbm [resolvable:$true] %s20
      %s22 = sshll.u32 [#allocation3], 4
      %s23 = int_to_ptr.vmem [resolvable:$true] %s22
      %28 = dma.hbm_to_vmem [thread:$0]  %s21, 256, %s23, [#allocation4], 128, 128, 8
    $region5: #{tpu_custom_call.1} parent=1 // pred_fallthru
      _
    // Predicated region
    $region6: #{tpu_custom_call.1} parent=1 // pred_check
      _
    $region7: #{tpu_custom_call.1} parent=1 // pred_check_branch
      %30 = sbr.rel (0) target = $region9
    $region8: #{tpu_custom_call.1} parent=1 // pred_region
      %s31 = sadd.s32 0, 0
      %p32 = scmp.lt.s32.totalorder %s31, 0
      %s33 = scalar_select %p32, %s31, 0
      %s34 = smul.u32 2, %s33
      %36 = vsyncadd [#allocation7], 0
      %s37 = smul.addr %s34, 8
      %s38 = scalar_lea.hbm %s1, %s37
      %s39 = sshll.u32 %s38, 4
      %s40 = int_to_ptr.hbm [resolvable:$true] %s39
      %s41 = sshll.u32 [#allocation6], 4
      %s42 = int_to_ptr.vmem [resolvable:$true] %s41
      %47 = dma.hbm_to_vmem [thread:$0]  %s40, 256, %s42, [#allocation7], 128, 128, 8
    $region9: #{tpu_custom_call.1} parent=1 // pred_fallthru
      _
    // Predicated region
    $region10: #{tpu_custom_call.1} parent=1 // pred_check
      _
    $region11: #{tpu_custom_call.1} parent=1 // pred_check_branch
      %49 = sbr.rel (0) target = $region13
    $region12: #{tpu_custom_call.1} parent=1 // pred_region
      %51 = dma.done [#allocation4], 256
    $region13: #{tpu_custom_call.1} parent=1 // pred_fallthru
      _
    // Predicated region
    $region14: #{tpu_custom_call.1} parent=1 // pred_check
      _
    $region15: #{tpu_custom_call.1} parent=1 // pred_check_branch
      %53 = sbr.rel (0) target = $region17
    $region16: #{tpu_custom_call.1} parent=1 // pred_region
      %55 = dma.done [#allocation7], 256
    $region17: #{tpu_custom_call.1} parent=1 // pred_fallthru
      _
    %s56 = sadd.s32 0, 0
    %p57 = scmp.lt.s32.totalorder %s56, 0
    %s58 = scalar_select %p57, %s56, 0
    %s59 = smul.u32 2, %s58
    %s60 = sadd.s32 0, 0
    %p61 = scmp.lt.s32.totalorder %s60, 0
    %s62 = scalar_select %p61, %s60, 0
    %s63 = smul.u32 2, %s62
    %s64 = sadd.s32 0, 0
    %p65 = scmp.eq.s32.totalorder 0, 0
    // Predicated region
    $region18: #{tpu_custom_call.1} parent=1 // pred_check
      %p66 = pneg %p65
    $region19: #{tpu_custom_call.1} parent=1 // pred_check_branch
      %68 = sbr.rel (%p66) target = $region21
    $region20: #{tpu_custom_call.1} parent=1 // pred_region
      %69 = vst [vmem:[#allocation2] sm:$0xff] 0.0
      %70 = vst [vmem:[#allocation2 + $0x8] sm:$0xff] 0.0
    $region21: #{tpu_custom_call.1} parent=1 // pred_fallthru
      _
    %v71 = vld [vmem:[#allocation3] sm:$0xff]
    %v72 = vld [vmem:[#allocation3 + $0x8] sm:$0xff]
    %v73 = vld [vmem:[#allocation6] sm:$0xff]
    %v74 = vld [vmem:[#allocation6 + $0x8] sm:$0xff]
    %v75 = vmul.f32 %v71, 0.5
    %v76 = vmul.f32 %v72, 0.5
    %v77 = vtanh.pop %v75
    %v78 = vtanh.pop %v76
    %v79 = vmul.f32 %v77, 0.5
    %v80 = vmul.f32 %v78, 0.5
    %v81 = vsub.f32 0.5, %v73
    %v82 = vsub.f32 0.5, %v74
    %v83 = vadd.f32 %v79, %v81
    %v84 = vadd.f32 %v80, %v82
    %v85 = vmul.f32 %v83, %v83
    %v86 = vmul.f32 %v84, %v84
    %p87 = scmp.lt.s32.totalorder %s64, 1
    // Predicated region
    $region22: #{tpu_custom_call.1} parent=1 // pred_check
      %p88 = pneg %p87
    $region23: #{tpu_custom_call.1} parent=1 // pred_check_branch
      %90 = sbr.rel (%p88) target = $region25
    $region24: #{tpu_custom_call.1} parent=1 // pred_region
      %v91 = vld [vmem:[#allocation2] sm:$0xff]
      %v92 = vld [vmem:[#allocation2 + $0x8] sm:$0xff]
      %v93 = vadd.f32 %v85, 0.0
      %v94 = vadd.f32 %v86, 0.0
      %v95 = vadd.f32 %v91, %v93
      %v96 = vadd.f32 %v92, %v94
      %97 = vst [vmem:[#allocation2] sm:$0xff] %v95
      %98 = vst [vmem:[#allocation2 + $0x8] sm:$0xff] %v96
    $region25: #{tpu_custom_call.1} parent=1 // pred_fallthru
      _
    // Predicated region
    $region26: #{tpu_custom_call.1} parent=1 // pred_check
      %p99 = pneg %p65
    $region27: #{tpu_custom_call.1} parent=1 // pred_check_branch
      %101 = sbr.rel (%p99) target = $region29
    $region28: #{tpu_custom_call.1} parent=1 // pred_region
      %v102 = vld [vmem:[#allocation2] sm:$0xff]
      %v103 = vld [vmem:[#allocation2 + $0x8] sm:$0xff]
      %v104 = vadd.f32 %v102, %v103
      %105 = vadd.xlane.f32.xlu0 %v104
      %v106 = vpop.xlane.xlu0 %105
      %v107 = vrot.slane %v106, 4
      %v108 = vadd.f32 %v106, %v107
      %v109 = vrot.slane %v108, 2
      %v110 = vadd.f32 %v108, %v109
      %v111 = vrot.slane %v110, 1
      %v112 = vadd.f32 %v110, %v111
      %s113 = vtos %v112
      %s114 = scalar_lea.smem [#allocation8], 0
      %115 = sst [smem:[%s114]] %s113
    $region29: #{tpu_custom_call.1} parent=1 // pred_fallthru
      _
    // Predicated region
    $region30: #{tpu_custom_call.1} parent=1 // pred_check
      _
    $region31: #{tpu_custom_call.1} parent=1 // pred_check_branch
      %117 = sbr.rel (0) target = $region33
    $region32: #{tpu_custom_call.1} parent=1 // pred_region
      %119 = vsyncadd [#allocation5], 0
      %s121 = sshll.u32 %s2, 4
      %s122 = int_to_ptr.hbm [resolvable:$true] %s121
      %124 = dma.smem_to_hbm [#allocation8], 16, %s122, [#allocation5]
    $region33: #{tpu_custom_call.1} parent=1 // pred_fallthru
      _
    // Predicated region
    $region34: #{tpu_custom_call.1} parent=1 // pred_check
      _
    $region35: #{tpu_custom_call.1} parent=1 // pred_check_branch
      %126 = sbr.rel (0) target = $region37
    $region36: #{tpu_custom_call.1} parent=1 // pred_region
      %128 = dma.done [#allocation5], 16
    $region37: #{tpu_custom_call.1} parent=1 // pred_fallthru
      _
    %129 = sfence
    %130 = vsyncpa [#allocation4], 1
    %131 = vsyncpa [#allocation7], 1
    %132 = vsyncpa [#allocation5], 1

</llo_original>
